<compile_context>
chip_gen: v6e
topology: v6e:2x2x1
jax: 0.10.0
libtpu: 0.0.40
codegen_flags: <defaults>
</compile_context>

<pallas_src>
import functools

import jax
import jax.numpy as jnp
from jax import lax
from jax.experimental import pallas as pl
from jax.experimental.pallas import tpu as pltpu


def _oafilter_kernel(*refs, n_real, use_shortcut_conv):
    if use_shortcut_conv:
        (x_ref, g1_ref, b1_ref, w1_ref, cb1_ref,
         gp_ref, bp_ref, wpT_ref, cbp_ref,
         g3_ref, b3_ref, w3_ref, cb3_ref,
         ws_ref, bs_ref, o_ref) = refs
    else:
        (x_ref, g1_ref, b1_ref, w1_ref, cb1_ref,
         gp_ref, bp_ref, wpT_ref, cbp_ref,
         g3_ref, b3_ref, w3_ref, cb3_ref,
         o_ref) = refs
        ws_ref = bs_ref = None

    eps_in = jnp.float32(1e-3)                 # InstanceNorm2d eps
    inv_n = jnp.float32(1.0 / n_real)

    x = x_ref[...].astype(jnp.float32)         # (C, Np)
    n_pad = x.shape[-1]

    def inst_norm(h):
        # Single-pass statistics.  Padded lanes of `h` are exactly zero, so
        # they contribute nothing to the sums; divide by the real point count.
        mu = jnp.sum(h, axis=-1, keepdims=True) * inv_n
        ex2 = jnp.sum(h * h, axis=-1, keepdims=True) * inv_n
        var = jnp.maximum(ex2 - mu * mu, 0.0)
        return (h - mu) * lax.rsqrt(var + eps_in)          # rsqrt -> EUP slot

    # ---- conv1: InstanceNorm -> BatchNorm(channels) -> ReLU -> 1x1 conv (channel mix)
    h = inst_norm(x)
    h = jnp.maximum(h * g1_ref[...] + b1_ref[...], 0.0)
    h1 = jnp.dot(w1_ref[...], h.astype(jnp.bfloat16),
                 preferred_element_type=jnp.float32) + cb1_ref[...]

    if n_pad != n_real:
        # Zero padded lanes once so they never leak into later statistics or
        # the point-mixing matmul (bias cbp is already zero on padded lanes).
        lane = lax.broadcasted_iota(jnp.int32, (1, n_pad), 1)
        h1 = jnp.where(lane < n_real, h1, 0.0)

    # ---- conv2: BatchNorm(points) -> ReLU -> point-mixing 1x1 conv, + residual.
    # Per-point params broadcast along lanes; mixing points is h @ Wp^T.
    t = jnp.maximum(h1 * gp_ref[...] + bp_ref[...], 0.0)
    t = jnp.dot(t.astype(jnp.bfloat16), wpT_ref[...],
                preferred_element_type=jnp.float32) + cbp_ref[...]
    h2 = h1 + t                                             # padded lanes stay 0

    # ---- conv3: InstanceNorm -> BatchNorm(out_channels) -> ReLU -> 1x1 conv
    h = inst_norm(h2)
    h = jnp.maximum(h * g3_ref[...] + b3_ref[...], 0.0)
    h3 = jnp.dot(w3_ref[...], h.astype(jnp.bfloat16),
                 preferred_element_type=jnp.float32) + cb3_ref[...]

    # ---- residual from the block input
    if use_shortcut_conv:
        sc = jnp.dot(ws_ref[...], x.astype(jnp.bfloat16),
                     preferred_element_type=jnp.float32) + bs_ref[...]
    else:
        sc = x
    o_ref[...] = (h3 + sc).astype(o_ref.dtype)


def oafilter_forward(x, params):
    """x: (B, channels, points, 1) OANet layout.  Returns (B, out_channels, points, 1)."""
    B, C, N, W = x.shape
    assert W == 1, "OAFilter expects (B, channels, points, 1) input"
    C_out = params["w1"].shape[0]
    use_shortcut_conv = params.get("ws") is not None

    Np = ((N + 127) // 128) * 128              # lane-dense point count
    pad = Np - N

    x3 = x.reshape(B, C, N)
    if pad:
        x3 = jnp.pad(x3, ((0, 0), (0, 0), (0, pad)))

    # Fold BatchNorm (eval mode, running stats) into scale/shift on the host.
    eps_bn = 1e-5

    def fold_bn(g, b, rm, rv):
        s = (g / jnp.sqrt(rv + eps_bn)).astype(jnp.float32)
        return s, (b - rm * s).astype(jnp.float32)

    g1, b1 = fold_bn(params["g1"], params["b1"], params["rm1"], params["rv1"])
    gp, bp = fold_bn(params["gp"], params["bp"], params["rmp"], params["rvp"])
    g3, b3 = fold_bn(params["g3"], params["b3"], params["rm3"], params["rv3"])

    # Per-channel vectors as (C, 1) columns; per-point vectors as (1, Np) rows.
    g1 = g1.reshape(C, 1)
    b1 = b1.reshape(C, 1)
    cb1 = params["cb1"].reshape(C_out, 1).astype(jnp.float32)
    g3 = g3.reshape(C_out, 1)
    b3 = b3.reshape(C_out, 1)
    cb3 = params["cb3"].reshape(C_out, 1).astype(jnp.float32)

    def pad_pt(v):
        v = v.reshape(1, N).astype(jnp.float32)
        return jnp.pad(v, ((0, 0), (0, pad))) if pad else v

    gp = pad_pt(gp)
    bp = pad_pt(bp)
    cbp = pad_pt(params["cbp"])

    # MXU operands in bf16 (accumulation stays f32 inside the kernel).
    w1 = params["w1"].astype(jnp.bfloat16)                        # (C_out, C)
    w3 = params["w3"].astype(jnp.bfloat16)                        # (C_out, C_out)
    wpT = params["wp"].T
    if pad:
        wpT = jnp.pad(wpT, ((0, pad), (0, pad)))
    wpT = wpT.astype(jnp.bfloat16)                                # (Np, Np)

    args = [x3, g1, b1, w1, cb1, gp, bp, wpT, cbp, g3, b3, w3, cb3]
    rep = lambda a: pl.BlockSpec(a.shape, lambda b: (0, 0))       # resident across grid
    in_specs = [pl.BlockSpec((None, C, Np), lambda b: (b, 0, 0))]
    in_specs += [rep(a) for a in args[1:]]

    if use_shortcut_conv:
        ws = params["ws"].astype(jnp.bfloat16)                    # (C_out, C)
        bs = params["bs"].reshape(C_out, 1).astype(jnp.float32)
        args += [ws, bs]
        in_specs += [rep(ws), rep(bs)]

    # VMEM budget: double-buffered I/O tiles + resident params + f32 working
    # set, clamped to stay safe on v7x (64 MiB physical VMEM).
    io_bytes = jnp.dtype(x.dtype).itemsize
    tile_bytes = io_bytes * (C + C_out) * Np
    weight_bytes = 2 * (C_out * C + Np * Np + C_out * C_out
                        + (C_out * C if use_shortcut_conv else 0))
    vec_bytes = 4 * (2 * C + 4 * C_out + 3 * Np)
    work_bytes = 4 * 4 * max(C, C_out) * Np
    vmem_limit = int(min(max(2 * 2 * tile_bytes + weight_bytes + vec_bytes
                             + work_bytes + (4 << 20), 16 << 20), 48 << 20))

    out3 = pl.pallas_call(
        functools.partial(_oafilter_kernel, n_real=N,
                          use_shortcut_conv=use_shortcut_conv),
        out_shape=jax.ShapeDtypeStruct((B, C_out, Np), x.dtype),
        grid=(B,),
        in_specs=in_specs,
        out_specs=pl.BlockSpec((None, C_out, Np), lambda b: (b, 0, 0)),
        compiler_params=pltpu.CompilerParams(
            dimension_semantics=("parallel",),
            vmem_limit_bytes=vmem_limit),
    )(*args)

    if pad:
        out3 = out3[:, :, :N]
    return out3.reshape(B, C_out, N, 1)


def oafilter_reference(x, params, matmul_dtype=jnp.float32):
    """Pure-JAX reference.  matmul_dtype=bf16 mirrors the kernel's MXU casts."""
    x32 = x.astype(jnp.float32)
    eps_bn = 1e-5

    def bn(h, g, b, rm, rv):
        shp = (1, -1, 1, 1)
        return ((h - rm.reshape(shp)) / jnp.sqrt(rv.reshape(shp) + eps_bn)
                * g.reshape(shp) + b.reshape(shp))

    def inorm(h):
        mu = jnp.mean(h, axis=(2, 3), keepdims=True)
        var = jnp.mean(jnp.square(h - mu), axis=(2, 3), keepdims=True)
        return (h - mu) / jnp.sqrt(var + 1e-3)

    def conv1x1(h, w, b):
        y = jnp.einsum("oc,bchw->bohw", w.astype(matmul_dtype),
                       h.astype(matmul_dtype),
                       preferred_element_type=jnp.float32)
        return y + b.astype(jnp.float32)[None, :, None, None]

    # conv1 (ends with transpose(1, 2))
    h = inorm(x32)
    h = bn(h, params["g1"], params["b1"], params["rm1"], params["rv1"])
    h = jnp.maximum(h, 0.0)
    h = conv1x1(h, params["w1"], params["cb1"])
    out = jnp.transpose(h, (0, 2, 1, 3))          # (B, N, C_out, 1)

    # conv2 + residual
    t = bn(out, params["gp"], params["bp"], params["rmp"], params["rvp"])
    t = jnp.maximum(t, 0.0)
    t = conv1x1(t, params["wp"], params["cbp"])
    out = out + t

    # conv3 (starts with transpose(1, 2))
    h = jnp.transpose(out, (0, 2, 1, 3))          # (B, C_out, N, 1)
    h = inorm(h)
    h = bn(h, params["g3"], params["b3"], params["rm3"], params["rv3"])
    h = jnp.maximum(h, 0.0)
    h = conv1x1(h, params["w3"], params["cb3"])

    if params.get("ws") is not None:
        sc = conv1x1(x32, params["ws"], params["bs"])
    else:
        sc = x32
    return h + sc


def make_params(key, channels, points, out_channels=None):
    if not out_channels:
        out_channels = channels
    ks = jax.random.split(key, 12)
    nrm = lambda k, shape, s=0.1: s * jax.random.normal(k, shape, jnp.float32)
    p = {
        # conv1: BatchNorm2d(channels) + Conv2d(channels -> out_channels, 1x1)
        "g1": 1.0 + nrm(ks[0], (channels,)), "b1": nrm(ks[1], (channels,)),
        "rm1": jnp.zeros((channels,), jnp.float32),
        "rv1": jnp.ones((channels,), jnp.float32),
        "w1": jax.random.normal(ks[2], (out_channels, channels), jnp.float32)
              / jnp.sqrt(channels),
        "cb1": nrm(ks[3], (out_channels,)),
        # conv2: BatchNorm2d(points) + Conv2d(points -> points, 1x1)
        "gp": 1.0 + nrm(ks[4], (points,)), "bp": nrm(ks[5], (points,)),
        "rmp": jnp.zeros((points,), jnp.float32),
        "rvp": jnp.ones((points,), jnp.float32),
        "wp": jax.random.normal(ks[6], (points, points), jnp.float32)
              / jnp.sqrt(points),
        "cbp": nrm(ks[7], (points,)),
        # conv3: BatchNorm2d(out_channels) + Conv2d(out_channels -> out_channels, 1x1)
        "g3": 1.0 + nrm(ks[8], (out_channels,)), "b3": nrm(ks[9], (out_channels,)),
        "rm3": jnp.zeros((out_channels,), jnp.float32),
        "rv3": jnp.ones((out_channels,), jnp.float32),
        "w3": jax.random.normal(ks[10], (out_channels, out_channels), jnp.float32)
              / jnp.sqrt(out_channels),
        "cb3": nrm(ks[11], (out_channels,)),
        "ws": None, "bs": None,
    }
    if out_channels != channels:
        kw, kb = jax.random.split(jax.random.fold_in(key, 99))
        p["ws"] = jax.random.normal(kw, (out_channels, channels), jnp.float32) \
                  / jnp.sqrt(channels)
        p["bs"] = nrm(kb, (out_channels,))
    return p


if __name__ == "__main__":
    key = jax.random.PRNGKey(0)
    kx, kp1, kp2 = jax.random.split(key, 3)

    # OANet-style input: (B, channels, points, 1)
    B, C, N = 2, 4, 16
    x = jax.random.normal(kx, (B, C, N, 1), jnp.float32)

    def check(out, params):
        # Tight check against a reference with matching bf16 MXU operands.
        ref_bf16 = oafilter_reference(x, params, matmul_dtype=jnp.bfloat16)
        assert jnp.allclose(out, ref_bf16, rtol=2e-3, atol=2e-3), \
            float(jnp.max(jnp.abs(out - ref_bf16)))
        # Looser sanity check against full-f32 module semantics (bf16 rounding).
        ref_f32 = oafilter_reference(x, params, matmul_dtype=jnp.float32)
        assert jnp.allclose(out, ref_f32, rtol=5e-2, atol=5e-2), \
            float(jnp.max(jnp.abs(out - ref_f32)))

    # Case 1: out_channels != channels -> shot_cut conv path
    params_sc = make_params(kp1, C, N, out_channels=8)
    out_sc = jax.block_until_ready(oafilter_forward(x, params_sc))
    assert out_sc.shape == (B, 8, N, 1)
    check(out_sc, params_sc)

    # Case 2: out_channels == channels -> identity residual path
    params_id = make_params(kp2, C, N)
    out_id = jax.block_until_ready(oafilter_forward(x, params_id))
    assert out_id.shape == (B, C, N, 1)
    check(out_id, params_id)

    print("KERNEL_OK")
</pallas_src>

<mosaic_0001>
module attributes {stable_mosaic.version = 11 : i64} {
  func.func @_oafilter_kernel(%arg0: i32, %arg1: memref<1x4x128xf32, #tpu.memory_space<vmem>>, %arg2: memref<4x1xf32, #tpu.memory_space<vmem>>, %arg3: memref<4x1xf32, #tpu.memory_space<vmem>>, %arg4: memref<8x4xbf16, #tpu.memory_space<vmem>>, %arg5: memref<8x1xf32, #tpu.memory_space<vmem>>, %arg6: memref<1x128xf32, #tpu.memory_space<vmem>>, %arg7: memref<1x128xf32, #tpu.memory_space<vmem>>, %arg8: memref<128x128xbf16, #tpu.memory_space<vmem>>, %arg9: memref<1x128xf32, #tpu.memory_space<vmem>>, %arg10: memref<8x1xf32, #tpu.memory_space<vmem>>, %arg11: memref<8x1xf32, #tpu.memory_space<vmem>>, %arg12: memref<8x8xbf16, #tpu.memory_space<vmem>>, %arg13: memref<8x1xf32, #tpu.memory_space<vmem>>, %arg14: memref<8x4xbf16, #tpu.memory_space<vmem>>, %arg15: memref<8x1xf32, #tpu.memory_space<vmem>>, %arg16: memref<1x8x128xf32, #tpu.memory_space<vmem>>) attributes {dimension_semantics = [#tpu.dimension_semantics<parallel>], iteration_bounds = array<i64: 2>, scalar_prefetch = 0 : i64, scratch_operands = 0 : i64, tpu.core_type = #tpu.core_type<tc>, window_params = [{transform_indices = @transform_0, window_bounds = array<i64: 1, 4, 128>}, {pipeline_mode = #tpu.pipeline_mode<synchronous>, transform_indices = @transform_1, window_bounds = array<i64: 4, 1>}, {pipeline_mode = #tpu.pipeline_mode<synchronous>, transform_indices = @transform_2, window_bounds = array<i64: 4, 1>}, {pipeline_mode = #tpu.pipeline_mode<synchronous>, transform_indices = @transform_3, window_bounds = array<i64: 8, 4>}, {pipeline_mode = #tpu.pipeline_mode<synchronous>, transform_indices = @transform_4, window_bounds = array<i64: 8, 1>}, {pipeline_mode = #tpu.pipeline_mode<synchronous>, transform_indices = @transform_5, window_bounds = array<i64: 1, 128>}, {pipeline_mode = #tpu.pipeline_mode<synchronous>, transform_indices = @transform_6, window_bounds = array<i64: 1, 128>}, {pipeline_mode = #tpu.pipeline_mode<synchronous>, transform_indices = @transform_7, window_bounds = array<i64: 128, 128>}, {pipeline_mode = #tpu.pipeline_mode<synchronous>, transform_indices = @transform_8, window_bounds = array<i64: 1, 128>}, {pipeline_mode = #tpu.pipeline_mode<synchronous>, transform_indices = @transform_9, window_bounds = array<i64: 8, 1>}, {pipeline_mode = #tpu.pipeline_mode<synchronous>, transform_indices = @transform_10, window_bounds = array<i64: 8, 1>}, {pipeline_mode = #tpu.pipeline_mode<synchronous>, transform_indices = @transform_11, window_bounds = array<i64: 8, 8>}, {pipeline_mode = #tpu.pipeline_mode<synchronous>, transform_indices = @transform_12, window_bounds = array<i64: 8, 1>}, {pipeline_mode = #tpu.pipeline_mode<synchronous>, transform_indices = @transform_13, window_bounds = array<i64: 8, 4>}, {pipeline_mode = #tpu.pipeline_mode<synchronous>, transform_indices = @transform_14, window_bounds = array<i64: 8, 1>}, {transform_indices = @transform_15, window_bounds = array<i64: 1, 8, 128>}]} {
    %c0 = arith.constant 0 : index
    %c0_0 = arith.constant 0 : index
    %c0_1 = arith.constant 0 : index
    %0 = vector.load %arg1[%c0, %c0_0, %c0_1] : memref<1x4x128xf32, #tpu.memory_space<vmem>>, vector<1x4x128xf32>
    %1 = vector.shape_cast %0 : vector<1x4x128xf32> to vector<4x128xf32>
    %cst = arith.constant dense<0.000000e+00> : vector<4xf32>
    %2 = vector.multi_reduction <add>, %1, %cst [1] : vector<4x128xf32> to vector<4xf32>
    %3 = vector.shape_cast %2 : vector<4xf32> to vector<4x1xf32>
    %cst_2 = arith.constant 6.250000e-02 : f32
    %4 = vector.broadcast %cst_2 : f32 to vector<4x1xf32>
    %5 = arith.mulf %3, %4 : vector<4x1xf32>
    %6 = arith.mulf %1, %1 : vector<4x128xf32>
    %cst_3 = arith.constant dense<0.000000e+00> : vector<4xf32>
    %7 = vector.multi_reduction <add>, %6, %cst_3 [1] : vector<4x128xf32> to vector<4xf32>
    %8 = vector.shape_cast %7 : vector<4xf32> to vector<4x1xf32>
    %cst_4 = arith.constant 6.250000e-02 : f32
    %9 = vector.broadcast %cst_4 : f32 to vector<4x1xf32>
    %10 = arith.mulf %8, %9 : vector<4x1xf32>
    %11 = arith.mulf %5, %5 : vector<4x1xf32>
    %12 = arith.subf %10, %11 : vector<4x1xf32>
    %cst_5 = arith.constant 0.000000e+00 : f32
    %13 = vector.broadcast %cst_5 : f32 to vector<4x1xf32>
    %14 = arith.maximumf %12, %13 : vector<4x1xf32>
    %15 = vector.broadcast %5 : vector<4x1xf32> to vector<4x128xf32>
    %16 = arith.subf %1, %15 : vector<4x128xf32>
    %cst_6 = arith.constant 1.000000e-03 : f32
    %17 = vector.broadcast %cst_6 : f32 to vector<4x1xf32>
    %18 = arith.addf %14, %17 : vector<4x1xf32>
    %19 = math.rsqrt %18 : vector<4x1xf32>
    %20 = vector.broadcast %19 : vector<4x1xf32> to vector<4x128xf32>
    %21 = arith.mulf %16, %20 : vector<4x128xf32>
    %c0_7 = arith.constant 0 : index
    %c0_8 = arith.constant 0 : index
    %22 = vector.load %arg2[%c0_7, %c0_8] : memref<4x1xf32, #tpu.memory_space<vmem>>, vector<4x1xf32>
    %23 = vector.broadcast %22 : vector<4x1xf32> to vector<4x128xf32>
    %24 = arith.mulf %21, %23 : vector<4x128xf32>
    %c0_9 = arith.constant 0 : index
    %c0_10 = arith.constant 0 : index
    %25 = vector.load %arg3[%c0_9, %c0_10] : memref<4x1xf32, #tpu.memory_space<vmem>>, vector<4x1xf32>
    %26 = vector.broadcast %25 : vector<4x1xf32> to vector<4x128xf32>
    %27 = arith.addf %24, %26 : vector<4x128xf32>
    %cst_11 = arith.constant 0.000000e+00 : f32
    %28 = vector.broadcast %cst_11 : f32 to vector<4x128xf32>
    %29 = arith.maximumf %27, %28 : vector<4x128xf32>
    %c0_12 = arith.constant 0 : index
    %c0_13 = arith.constant 0 : index
    %30 = vector.load %arg4[%c0_12, %c0_13] : memref<8x4xbf16, #tpu.memory_space<vmem>>, vector<8x4xbf16>
    %31 = arith.truncf %29 : vector<4x128xf32> to vector<4x128xbf16>
    %cst_14 = arith.constant dense<0.000000e+00> : vector<8x128xf32>
    %32 = tpu.matmul %30, %31, %cst_14 {dimension_numbers = #tpu.dot_dimension_numbers<[1], [0], [0], [1], [0, 0, 1, 1], [], []>} : vector<8x4xbf16>, vector<4x128xbf16>, vector<8x128xf32> -> vector<8x128xf32>
    %c0_15 = arith.constant 0 : index
    %c0_16 = arith.constant 0 : index
    %33 = vector.load %arg5[%c0_15, %c0_16] : memref<8x1xf32, #tpu.memory_space<vmem>>, vector<8x1xf32>
    %34 = vector.broadcast %33 : vector<8x1xf32> to vector<8x128xf32>
    %35 = arith.addf %32, %34 : vector<8x128xf32>
    %36 = tpu.iota {dimensions = array<i32: 1>} : vector<1x128xi32>
    %c16_i32 = arith.constant 16 : i32
    %37 = vector.broadcast %c16_i32 : i32 to vector<1x128xi32>
    %38 = arith.cmpi slt, %36, %37 : vector<1x128xi32>
    %cst_17 = arith.constant 0.000000e+00 : f32
    %39 = vector.shape_cast %38 : vector<1x128xi1> to vector<1x128xi1>
    %40 = vector.broadcast %39 : vector<1x128xi1> to vector<8x128xi1>
    %41 = vector.broadcast %cst_17 : f32 to vector<8x128xf32>
    %42 = arith.select %40, %35, %41 : vector<8x128xi1>, vector<8x128xf32>
    %c0_18 = arith.constant 0 : index
    %c0_19 = arith.constant 0 : index
    %43 = vector.load %arg6[%c0_18, %c0_19] : memref<1x128xf32, #tpu.memory_space<vmem>>, vector<1x128xf32>
    %44 = vector.broadcast %43 : vector<1x128xf32> to vector<8x128xf32>
    %45 = arith.mulf %42, %44 : vector<8x128xf32>
    %c0_20 = arith.constant 0 : index
    %c0_21 = arith.constant 0 : index
    %46 = vector.load %arg7[%c0_20, %c0_21] : memref<1x128xf32, #tpu.memory_space<vmem>>, vector<1x128xf32>
    %47 = vector.broadcast %46 : vector<1x128xf32> to vector<8x128xf32>
    %48 = arith.addf %45, %47 : vector<8x128xf32>
    %cst_22 = arith.constant 0.000000e+00 : f32
    %49 = vector.broadcast %cst_22 : f32 to vector<8x128xf32>
    %50 = arith.maximumf %48, %49 : vector<8x128xf32>
    %51 = arith.truncf %50 : vector<8x128xf32> to vector<8x128xbf16>
    %c0_23 = arith.constant 0 : index
    %c0_24 = arith.constant 0 : index
    %52 = vector.load %arg8[%c0_23, %c0_24] : memref<128x128xbf16, #tpu.memory_space<vmem>>, vector<128x128xbf16>
    %cst_25 = arith.constant dense<0.000000e+00> : vector<8x128xf32>
    %53 = tpu.matmul %51, %52, %cst_25 {dimension_numbers = #tpu.dot_dimension_numbers<[1], [0], [0], [1], [0, 0, 1, 1], [], []>} : vector<8x128xbf16>, vector<128x128xbf16>, vector<8x128xf32> -> vector<8x128xf32>
    %c0_26 = arith.constant 0 : index
    %c0_27 = arith.constant 0 : index
    %54 = vector.load %arg9[%c0_26, %c0_27] : memref<1x128xf32, #tpu.memory_space<vmem>>, vector<1x128xf32>
    %55 = vector.broadcast %54 : vector<1x128xf32> to vector<8x128xf32>
    %56 = arith.addf %53, %55 : vector<8x128xf32>
    %57 = arith.addf %42, %56 : vector<8x128xf32>
    %cst_28 = arith.constant dense<0.000000e+00> : vector<8xf32>
    %58 = vector.multi_reduction <add>, %57, %cst_28 [1] : vector<8x128xf32> to vector<8xf32>
    %59 = vector.shape_cast %58 : vector<8xf32> to vector<8x1xf32>
    %cst_29 = arith.constant 6.250000e-02 : f32
    %60 = vector.broadcast %cst_29 : f32 to vector<8x1xf32>
    %61 = arith.mulf %59, %60 : vector<8x1xf32>
    %62 = arith.mulf %57, %57 : vector<8x128xf32>
    %cst_30 = arith.constant dense<0.000000e+00> : vector<8xf32>
    %63 = vector.multi_reduction <add>, %62, %cst_30 [1] : vector<8x128xf32> to vector<8xf32>
    %64 = vector.shape_cast %63 : vector<8xf32> to vector<8x1xf32>
    %cst_31 = arith.constant 6.250000e-02 : f32
    %65 = vector.broadcast %cst_31 : f32 to vector<8x1xf32>
    %66 = arith.mulf %64, %65 : vector<8x1xf32>
    %67 = arith.mulf %61, %61 : vector<8x1xf32>
    %68 = arith.subf %66, %67 : vector<8x1xf32>
    %cst_32 = arith.constant 0.000000e+00 : f32
    %69 = vector.broadcast %cst_32 : f32 to vector<8x1xf32>
    %70 = arith.maximumf %68, %69 : vector<8x1xf32>
    %71 = vector.broadcast %61 : vector<8x1xf32> to vector<8x128xf32>
    %72 = arith.subf %57, %71 : vector<8x128xf32>
    %cst_33 = arith.constant 1.000000e-03 : f32
    %73 = vector.broadcast %cst_33 : f32 to vector<8x1xf32>
    %74 = arith.addf %70, %73 : vector<8x1xf32>
    %75 = math.rsqrt %74 : vector<8x1xf32>
    %76 = vector.broadcast %75 : vector<8x1xf32> to vector<8x128xf32>
    %77 = arith.mulf %72, %76 : vector<8x128xf32>
    %c0_34 = arith.constant 0 : index
    %c0_35 = arith.constant 0 : index
    %78 = vector.load %arg10[%c0_34, %c0_35] : memref<8x1xf32, #tpu.memory_space<vmem>>, vector<8x1xf32>
    %79 = vector.broadcast %78 : vector<8x1xf32> to vector<8x128xf32>
    %80 = arith.mulf %77, %79 : vector<8x128xf32>
    %c0_36 = arith.constant 0 : index
    %c0_37 = arith.constant 0 : index
    %81 = vector.load %arg11[%c0_36, %c0_37] : memref<8x1xf32, #tpu.memory_space<vmem>>, vector<8x1xf32>
    %82 = vector.broadcast %81 : vector<8x1xf32> to vector<8x128xf32>
    %83 = arith.addf %80, %82 : vector<8x128xf32>
    %cst_38 = arith.constant 0.000000e+00 : f32
    %84 = vector.broadcast %cst_38 : f32 to vector<8x128xf32>
    %85 = arith.maximumf %83, %84 : vector<8x128xf32>
    %c0_39 = arith.constant 0 : index
    %c0_40 = arith.constant 0 : index
    %86 = vector.load %arg12[%c0_39, %c0_40] : memref<8x8xbf16, #tpu.memory_space<vmem>>, vector<8x8xbf16>
    %87 = arith.truncf %85 : vector<8x128xf32> to vector<8x128xbf16>
    %cst_41 = arith.constant dense<0.000000e+00> : vector<8x128xf32>
    %88 = tpu.matmul %86, %87, %cst_41 {dimension_numbers = #tpu.dot_dimension_numbers<[1], [0], [0], [1], [0, 0, 1, 1], [], []>} : vector<8x8xbf16>, vector<8x128xbf16>, vector<8x128xf32> -> vector<8x128xf32>
    %c0_42 = arith.constant 0 : index
    %c0_43 = arith.constant 0 : index
    %89 = vector.load %arg13[%c0_42, %c0_43] : memref<8x1xf32, #tpu.memory_space<vmem>>, vector<8x1xf32>
    %90 = vector.broadcast %89 : vector<8x1xf32> to vector<8x128xf32>
    %91 = arith.addf %88, %90 : vector<8x128xf32>
    %c0_44 = arith.constant 0 : index
    %c0_45 = arith.constant 0 : index
    %92 = vector.load %arg14[%c0_44, %c0_45] : memref<8x4xbf16, #tpu.memory_space<vmem>>, vector<8x4xbf16>
    %93 = arith.truncf %1 : vector<4x128xf32> to vector<4x128xbf16>
    %cst_46 = arith.constant dense<0.000000e+00> : vector<8x128xf32>
    %94 = tpu.matmul %92, %93, %cst_46 {dimension_numbers = #tpu.dot_dimension_numbers<[1], [0], [0], [1], [0, 0, 1, 1], [], []>} : vector<8x4xbf16>, vector<4x128xbf16>, vector<8x128xf32> -> vector<8x128xf32>
    %c0_47 = arith.constant 0 : index
    %c0_48 = arith.constant 0 : index
    %95 = vector.load %arg15[%c0_47, %c0_48] : memref<8x1xf32, #tpu.memory_space<vmem>>, vector<8x1xf32>
    %96 = vector.broadcast %95 : vector<8x1xf32> to vector<8x128xf32>
    %97 = arith.addf %94, %96 : vector<8x128xf32>
    %98 = arith.addf %91, %97 : vector<8x128xf32>
    %c0_49 = arith.constant 0 : index
    %c0_50 = arith.constant 0 : index
    %c0_51 = arith.constant 0 : index
    %99 = vector.load %arg16[%c0_49, %c0_50, %c0_51] : memref<1x8x128xf32, #tpu.memory_space<vmem>>, vector<1x8x128xf32>
    %100 = vector.shape_cast %99 : vector<1x8x128xf32> to vector<8x128xf32>
    %101 = vector.shape_cast %98 : vector<8x128xf32> to vector<1x8x128xf32>
    tpu.vector_store %arg16[%c0_49, %c0_50, %c0_51], %101 {strides = array<i32>} : memref<1x8x128xf32, #tpu.memory_space<vmem>>, vector<1x8x128xf32>,
    return
  }
  func.func @transform_0(%arg0: i32) -> (i32, i32, i32) {
    %c0_i32 = arith.constant 0 : i32
    %c0_i32_0 = arith.constant 0 : i32
    %c0_i32_1 = arith.constant 0 : i32
    return %arg0, %c0_i32, %c0_i32_0 : i32, i32, i32
  }
  func.func @transform_1(%arg0: i32) -> (i32, i32) {
    %c0_i32 = arith.constant 0 : i32
    %c0_i32_0 = arith.constant 0 : i32
    %c0_i32_1 = arith.constant 0 : i32
    return %c0_i32, %c0_i32_0 : i32, i32
  }
  func.func @transform_2(%arg0: i32) -> (i32, i32) {
    %c0_i32 = arith.constant 0 : i32
    %c0_i32_0 = arith.constant 0 : i32
    %c0_i32_1 = arith.constant 0 : i32
    return %c0_i32, %c0_i32_0 : i32, i32
  }
  func.func @transform_3(%arg0: i32) -> (i32, i32) {
    %c0_i32 = arith.constant 0 : i32
    %c0_i32_0 = arith.constant 0 : i32
    %c0_i32_1 = arith.constant 0 : i32
    return %c0_i32, %c0_i32_0 : i32, i32
  }
  func.func @transform_4(%arg0: i32) -> (i32, i32) {
    %c0_i32 = arith.constant 0 : i32
    %c0_i32_0 = arith.constant 0 : i32
    %c0_i32_1 = arith.constant 0 : i32
    return %c0_i32, %c0_i32_0 : i32, i32
  }
  func.func @transform_5(%arg0: i32) -> (i32, i32) {
    %c0_i32 = arith.constant 0 : i32
    %c0_i32_0 = arith.constant 0 : i32
    %c0_i32_1 = arith.constant 0 : i32
    return %c0_i32, %c0_i32_0 : i32, i32
  }
  func.func @transform_6(%arg0: i32) -> (i32, i32) {
    %c0_i32 = arith.constant 0 : i32
    %c0_i32_0 = arith.constant 0 : i32
    %c0_i32_1 = arith.constant 0 : i32
    return %c0_i32, %c0_i32_0 : i32, i32
  }
  func.func @transform_7(%arg0: i32) -> (i32, i32) {
    %c0_i32 = arith.constant 0 : i32
    %c0_i32_0 = arith.constant 0 : i32
    %c0_i32_1 = arith.constant 0 : i32
    return %c0_i32, %c0_i32_0 : i32, i32
  }
  func.func @transform_8(%arg0: i32) -> (i32, i32) {
    %c0_i32 = arith.constant 0 : i32
    %c0_i32_0 = arith.constant 0 : i32
    %c0_i32_1 = arith.constant 0 : i32
    return %c0_i32, %c0_i32_0 : i32, i32
  }
  func.func @transform_9(%arg0: i32) -> (i32, i32) {
    %c0_i32 = arith.constant 0 : i32
    %c0_i32_0 = arith.constant 0 : i32
    %c0_i32_1 = arith.constant 0 : i32
    return %c0_i32, %c0_i32_0 : i32, i32
  }
  func.func @transform_10(%arg0: i32) -> (i32, i32) {
    %c0_i32 = arith.constant 0 : i32
    %c0_i32_0 = arith.constant 0 : i32
    %c0_i32_1 = arith.constant 0 : i32
    return %c0_i32, %c0_i32_0 : i32, i32
  }
  func.func @transform_11(%arg0: i32) -> (i32, i32) {
    %c0_i32 = arith.constant 0 : i32
    %c0_i32_0 = arith.constant 0 : i32
    %c0_i32_1 = arith.constant 0 : i32
    return %c0_i32, %c0_i32_0 : i32, i32
  }
  func.func @transform_12(%arg0: i32) -> (i32, i32) {
    %c0_i32 = arith.constant 0 : i32
    %c0_i32_0 = arith.constant 0 : i32
    %c0_i32_1 = arith.constant 0 : i32
    return %c0_i32, %c0_i32_0 : i32, i32
  }
  func.func @transform_13(%arg0: i32) -> (i32, i32) {
    %c0_i32 = arith.constant 0 : i32
    %c0_i32_0 = arith.constant 0 : i32
    %c0_i32_1 = arith.constant 0 : i32
    return %c0_i32, %c0_i32_0 : i32, i32
  }
  func.func @transform_14(%arg0: i32) -> (i32, i32) {
    %c0_i32 = arith.constant 0 : i32
    %c0_i32_0 = arith.constant 0 : i32
    %c0_i32_1 = arith.constant 0 : i32
    return %c0_i32, %c0_i32_0 : i32, i32
  }
  func.func @transform_15(%arg0: i32) -> (i32, i32, i32) {
    %c0_i32 = arith.constant 0 : i32
    %c0_i32_0 = arith.constant 0 : i32
    %c0_i32_1 = arith.constant 0 : i32
    return %arg0, %c0_i32, %c0_i32_0 : i32, i32, i32
  }
}

</mosaic_0001>

<llo_original>
// kernel: tpu_custom_call.1
$region0: #{tpu_custom_call.1}
  #allocation0 [shape = 'u32[]', space=smem, size = 0x4, offset = 0x4, fixed_abs, tag = 'smem constant byte address 0x4 - core index']
  #allocation1 [shape = 'u32[144,128]{1,0:T(1,128)}', space=vmem, size = 0x12000, scoped, tag = 'internal scratch']
  %s0 = inlined_call_operand.vmem [shape: f32[2,4,128], index: 0, kind: input, shape index: {}]
  %s1 = inlined_call_operand.vmem [shape: f32[4,1], index: 1, kind: input, shape index: {}]
  %s2 = inlined_call_operand.vmem [shape: f32[4,1], index: 2, kind: input, shape index: {}]
  %s3 = inlined_call_operand.vmem [shape: bf16[8,4], index: 3, kind: input, shape index: {}]
  %s4 = inlined_call_operand.vmem [shape: f32[8,1], index: 4, kind: input, shape index: {}]
  %s5 = inlined_call_operand.hbm [shape: f32[1,128], index: 5, kind: input, shape index: {}]
  %s6 = inlined_call_operand.hbm [shape: f32[1,128], index: 6, kind: input, shape index: {}]
  %s7 = inlined_call_operand.vmem [shape: bf16[128,128], index: 7, kind: input, shape index: {}]
  %s8 = inlined_call_operand.hbm [shape: f32[1,128], index: 8, kind: input, shape index: {}]
  %s9 = inlined_call_operand.vmem [shape: f32[8,1], index: 9, kind: input, shape index: {}]
  %s10 = inlined_call_operand.vmem [shape: f32[8,1], index: 10, kind: input, shape index: {}]
  %s11 = inlined_call_operand.vmem [shape: bf16[8,8], index: 11, kind: input, shape index: {}]
  %s12 = inlined_call_operand.vmem [shape: f32[8,1], index: 12, kind: input, shape index: {}]
  %s13 = inlined_call_operand.vmem [shape: bf16[8,4], index: 13, kind: input, shape index: {}]
  %s14 = inlined_call_operand.vmem [shape: f32[8,1], index: 14, kind: input, shape index: {}]
  %s15 = inlined_call_operand.hbm [shape: f32[2,8,128], index: 15, kind: output, shape index: {}]
  %s16 = sld [smem:[#allocation0]]
  $region105: #{tpu_custom_call.1} parent=0
    _
  %s18 = ssub.s32 1, %s16
  %s19 = scalar_select 0, %s18, %s16
  $region1: #{tpu_custom_call.1} parent=0
    #allocation2 [shape = 'u8[512]{0}', space=vmem, size = 0x400, scoped, tag = 'input window, operand 5, single buffered']
    #allocation3 [shape = 's32[2]{0}', space=sflag, size = 0x8, scoped, tag = 'scoped memory for tpu_custom_call.1']
    #allocation4 [shape = 's32[2]{0}', space=sflag, size = 0x8, scoped, tag = 'scoped memory for tpu_custom_call.1']
    #allocation5 [shape = 'u8[512]{0}', space=vmem, size = 0x400, scoped, tag = 'input window, operand 6, single buffered']
    #allocation6 [shape = 's32[1]{0}', space=sflag, size = 0x4, scoped, tag = 'scoped memory for tpu_custom_call.1']
    #allocation7 [shape = 'u8[512]{0}', space=vmem, size = 0x400, scoped, tag = 'input window, operand 8, single buffered']
    #allocation8 [shape = 'u8[8192]{0}', space=vmem, size = 0x2000, scoped, tag = 'output window, operand 0']
    %20 = vsyncpa [#allocation3], 0
    %21 = vsyncpa [#allocation6], 0
    %22 = vsyncpa [#allocation4], 0
    %s23 = scalar_lea.sflag [#allocation4], 1
    %24 = vsyncpa %s23, 0
    loop: start=0, step=1, limit=4
    $region2: #{tpu_custom_call.1} parent=1 // loop_pre_header
      _
    $region3: #{tpu_custom_call.1} parent=1 // loop_header
      %s26 = sphi 0, %s30
      %p27 = scmp.ge.s32.totalorder %s26, 4
      %s36 = sphi 0, %s38
      %s39 = sphi 0, %s36
      %s40 = sphi 0, %s39
      %s56 = sphi 0, %s40
      %s60 = sphi 0, %s60
      %s62 = sphi 0, %s60
      %s63 = sphi 0, %s62
      %s77 = sphi 0, %s63
      %s81 = sphi 0, %s81
      %s83 = sphi 0, %s81
      %s84 = sphi 0, %s83
      %s98 = sphi 0, %s84
      %s102 = sphi 0, %s102
      %s104 = sphi 0, %s102
      %s105 = sphi 0, %s104
      %s119 = sphi 0, %s105
      %s123 = sphi 0, %s123
      %s125 = sphi 0, %s123
      %s126 = sphi 0, %s125
      %s140 = sphi 0, %s126
      %s144 = sphi 0, %s144
      %s146 = sphi 0, %s144
      %s147 = sphi 0, %s146
      %s161 = sphi 0, %s147
      %s165 = sphi 0, %s165
      %s167 = sphi 0, %s165
      %s168 = sphi 0, %s167
      %s182 = sphi 0, %s168
      %s186 = sphi 0, %s186
      %s188 = sphi 0, %s186
      %s189 = sphi 0, %s188
      %s203 = sphi 0, %s189
      %s207 = sphi 0, %s207
      %s209 = sphi 0, %s207
      %s210 = sphi 0, %s209
      %s224 = sphi 0, %s210
      %s228 = sphi 0, %s228
      %s230 = sphi 0, %s228
      %s231 = sphi 0, %s230
      %s245 = sphi 0, %s231
      %s249 = sphi 0, %s249
      %s251 = sphi 0, %s249
      %s252 = sphi 0, %s251
      %s266 = sphi 0, %s252
      %s270 = sphi 0, %s270
      %s272 = sphi 0, %s270
      %s273 = sphi 0, %s272
      %s287 = sphi 0, %s273
      %s291 = sphi 0, %s291
      %s293 = sphi 0, %s291
      %s294 = sphi 0, %s293
      %s308 = sphi 0, %s294
      %s312 = sphi 0, %s312
      %s314 = sphi 0, %s312
      %s315 = sphi 0, %s314
      %s329 = sphi 0, %s315
      %s333 = sphi 0, %s333
      %s335 = sphi 0, %s333
      %s336 = sphi 0, %s335
      %s350 = sphi 0, %s336
      %s356 = sphi 0, %s358
      %s359 = sphi 0, %s356
      %s360 = sphi 0, %s359
      %s376 = sphi 0, %s360
    $region4: #{tpu_custom_call.1} parent=1 // loop_header_branch
      %29 = sbr.rel (%p27) target = $region8
    $region5: #{tpu_custom_call.1} parent=1 // loop_body
      %s31 = ssub.s32 %s26, 1
      %s32 = ssub.s32 %s26, 2
      %s33 = sadd.s32 %s26, 1
      %s34 = ssub.s32 %s26, %s33
      %p35 = scmp.eq.s32.totalorder %s34, 0
      %s37 = sadd.s32 %s36, 1
      %s38 = scalar_select %p35, %s36, %s37
      %p41 = pneg %p35
      %p42 = scmp.eq.s32.totalorder %s26, 1
      %p43 = por %p41, %p42
      %p44 = scmp.ne.s32.totalorder %s36, %s39
      %p45 = scmp.eq.s32.totalorder %s26, 0
      %p46 = por %p44, %p45
      %p47 = scmp.ne.s32.totalorder %s36, %s39
      %p48 = scmp.eq.s32.totalorder %s31, 1
      %p49 = por %p47, %p48
      %p50 = scmp.ne.s32.totalorder %s39, %s40
      %p51 = scmp.eq.s32.totalorder %s31, 0
      %p52 = por %p50, %p51
      %p53 = scmp.ne.s32.totalorder %s39, %s40
      %p54 = scmp.eq.s32.totalorder %s32, 1
      %p55 = por %p53, %p54
      %p57 = scmp.ne.s32.totalorder %s40, %s56
      %p58 = scmp.eq.s32.totalorder %s32, 0
      %p59 = por %p57, %p58
      %s61 = sadd.s32 %s60, 1
      %p64 = scmp.eq.s32.totalorder %s26, 1
      %p65 = scmp.ne.s32.totalorder %s60, %s62
      %p66 = scmp.eq.s32.totalorder %s26, 0
      %p67 = por %p65, %p66
      %p68 = scmp.ne.s32.totalorder %s60, %s62
      %p69 = scmp.eq.s32.totalorder %s31, 1
      %p70 = por %p68, %p69
      %p71 = scmp.ne.s32.totalorder %s62, %s63
      %p72 = scmp.eq.s32.totalorder %s31, 0
      %p73 = por %p71, %p72
      %p74 = scmp.ne.s32.totalorder %s62, %s63
      %p75 = scmp.eq.s32.totalorder %s32, 1
      %p76 = por %p74, %p75
      %p78 = scmp.ne.s32.totalorder %s63, %s77
      %p79 = scmp.eq.s32.totalorder %s32, 0
      %p80 = por %p78, %p79
      %s82 = sadd.s32 %s81, 1
      %p85 = scmp.eq.s32.totalorder %s26, 1
      %p86 = scmp.ne.s32.totalorder %s81, %s83
      %p87 = scmp.eq.s32.totalorder %s26, 0
      %p88 = por %p86, %p87
      %p89 = scmp.ne.s32.totalorder %s81, %s83
      %p90 = scmp.eq.s32.totalorder %s31, 1
      %p91 = por %p89, %p90
      %p92 = scmp.ne.s32.totalorder %s83, %s84
      %p93 = scmp.eq.s32.totalorder %s31, 0
      %p94 = por %p92, %p93
      %p95 = scmp.ne.s32.totalorder %s83, %s84
      %p96 = scmp.eq.s32.totalorder %s32, 1
      %p97 = por %p95, %p96
      %p99 = scmp.ne.s32.totalorder %s84, %s98
      %p100 = scmp.eq.s32.totalorder %s32, 0
      %p101 = por %p99, %p100
      %s103 = sadd.s32 %s102, 1
      %p106 = scmp.eq.s32.totalorder %s26, 1
      %p107 = scmp.ne.s32.totalorder %s102, %s104
      %p108 = scmp.eq.s32.totalorder %s26, 0
      %p109 = por %p107, %p108
      %p110 = scmp.ne.s32.totalorder %s102, %s104
      %p111 = scmp.eq.s32.totalorder %s31, 1
      %p112 = por %p110, %p111
      %p113 = scmp.ne.s32.totalorder %s104, %s105
      %p114 = scmp.eq.s32.totalorder %s31, 0
      %p115 = por %p113, %p114
      %p116 = scmp.ne.s32.totalorder %s104, %s105
      %p117 = scmp.eq.s32.totalorder %s32, 1
      %p118 = por %p116, %p117
      %p120 = scmp.ne.s32.totalorder %s105, %s119
      %p121 = scmp.eq.s32.totalorder %s32, 0
      %p122 = por %p120, %p121
      %s124 = sadd.s32 %s123, 1
      %p127 = scmp.eq.s32.totalorder %s26, 1
      %p128 = scmp.ne.s32.totalorder %s123, %s125
      %p129 = scmp.eq.s32.totalorder %s26, 0
      %p130 = por %p128, %p129
      %p131 = scmp.ne.s32.totalorder %s123, %s125
      %p132 = scmp.eq.s32.totalorder %s31, 1
      %p133 = por %p131, %p132
      %p134 = scmp.ne.s32.totalorder %s125, %s126
      %p135 = scmp.eq.s32.totalorder %s31, 0
      %p136 = por %p134, %p135
      %p137 = scmp.ne.s32.totalorder %s125, %s126
      %p138 = scmp.eq.s32.totalorder %s32, 1
      %p139 = por %p137, %p138
      %p141 = scmp.ne.s32.totalorder %s126, %s140
      %p142 = scmp.eq.s32.totalorder %s32, 0
      %p143 = por %p141, %p142
      %s145 = sadd.s32 %s144, 1
      %p148 = scmp.eq.s32.totalorder %s26, 1
      %p149 = scmp.ne.s32.totalorder %s144, %s146
      %p150 = scmp.eq.s32.totalorder %s26, 0
      %p151 = por %p149, %p150
      %p152 = scmp.ne.s32.totalorder %s144, %s146
      %p153 = scmp.eq.s32.totalorder %s31, 1
      %p154 = por %p152, %p153
      %p155 = scmp.ne.s32.totalorder %s146, %s147
      %p156 = scmp.eq.s32.totalorder %s31, 0
      %p157 = por %p155, %p156
      %p158 = scmp.ne.s32.totalorder %s146, %s147
      %p159 = scmp.eq.s32.totalorder %s32, 1
      %p160 = por %p158, %p159
      %p162 = scmp.ne.s32.totalorder %s147, %s161
      %p163 = scmp.eq.s32.totalorder %s32, 0
      %p164 = por %p162, %p163
      %s166 = sadd.s32 %s165, 1
      %p169 = scmp.eq.s32.totalorder %s26, 1
      %p170 = scmp.ne.s32.totalorder %s165, %s167
      %p171 = scmp.eq.s32.totalorder %s26, 0
      %p172 = por %p170, %p171
      %p173 = scmp.ne.s32.totalorder %s165, %s167
      %p174 = scmp.eq.s32.totalorder %s31, 1
      %p175 = por %p173, %p174
      %p176 = scmp.ne.s32.totalorder %s167, %s168
      %p177 = scmp.eq.s32.totalorder %s31, 0
      %p178 = por %p176, %p177
      %p179 = scmp.ne.s32.totalorder %s167, %s168
      %p180 = scmp.eq.s32.totalorder %s32, 1
      %p181 = por %p179, %p180
      %p183 = scmp.ne.s32.totalorder %s168, %s182
      %p184 = scmp.eq.s32.totalorder %s32, 0
      %p185 = por %p183, %p184
      %s187 = sadd.s32 %s186, 1
      %p190 = scmp.eq.s32.totalorder %s26, 1
      %p191 = scmp.ne.s32.totalorder %s186, %s188
      %p192 = scmp.eq.s32.totalorder %s26, 0
      %p193 = por %p191, %p192
      %p194 = scmp.ne.s32.totalorder %s186, %s188
      %p195 = scmp.eq.s32.totalorder %s31, 1
      %p196 = por %p194, %p195
      %p197 = scmp.ne.s32.totalorder %s188, %s189
      %p198 = scmp.eq.s32.totalorder %s31, 0
      %p199 = por %p197, %p198
      %p200 = scmp.ne.s32.totalorder %s188, %s189
      %p201 = scmp.eq.s32.totalorder %s32, 1
      %p202 = por %p200, %p201
      %p204 = scmp.ne.s32.totalorder %s189, %s203
      %p205 = scmp.eq.s32.totalorder %s32, 0
      %p206 = por %p204, %p205
      %s208 = sadd.s32 %s207, 1
      %p211 = scmp.eq.s32.totalorder %s26, 1
      %p212 = scmp.ne.s32.totalorder %s207, %s209
      %p213 = scmp.eq.s32.totalorder %s26, 0
      %p214 = por %p212, %p213
      %p215 = scmp.ne.s32.totalorder %s207, %s209
      %p216 = scmp.eq.s32.totalorder %s31, 1
      %p217 = por %p215, %p216
      %p218 = scmp.ne.s32.totalorder %s209, %s210
      %p219 = scmp.eq.s32.totalorder %s31, 0
      %p220 = por %p218, %p219
      %p221 = scmp.ne.s32.totalorder %s209, %s210
      %p222 = scmp.eq.s32.totalorder %s32, 1
      %p223 = por %p221, %p222
      %p225 = scmp.ne.s32.totalorder %s210, %s224
      %p226 = scmp.eq.s32.totalorder %s32, 0
      %p227 = por %p225, %p226
      %s229 = sadd.s32 %s228, 1
      %p232 = scmp.eq.s32.totalorder %s26, 1
      %p233 = scmp.ne.s32.totalorder %s228, %s230
      %p234 = scmp.eq.s32.totalorder %s26, 0
      %p235 = por %p233, %p234
      %p236 = scmp.ne.s32.totalorder %s228, %s230
      %p237 = scmp.eq.s32.totalorder %s31, 1
      %p238 = por %p236, %p237
      %p239 = scmp.ne.s32.totalorder %s230, %s231
      %p240 = scmp.eq.s32.totalorder %s31, 0
      %p241 = por %p239, %p240
      %p242 = scmp.ne.s32.totalorder %s230, %s231
      %p243 = scmp.eq.s32.totalorder %s32, 1
      %p244 = por %p242, %p243
      %p246 = scmp.ne.s32.totalorder %s231, %s245
      %p247 = scmp.eq.s32.totalorder %s32, 0
      %p248 = por %p246, %p247
      %s250 = sadd.s32 %s249, 1
      %p253 = scmp.eq.s32.totalorder %s26, 1
      %p254 = scmp.ne.s32.totalorder %s249, %s251
      %p255 = scmp.eq.s32.totalorder %s26, 0
      %p256 = por %p254, %p255
      %p257 = scmp.ne.s32.totalorder %s249, %s251
      %p258 = scmp.eq.s32.totalorder %s31, 1
      %p259 = por %p257, %p258
      %p260 = scmp.ne.s32.totalorder %s251, %s252
      %p261 = scmp.eq.s32.totalorder %s31, 0
      %p262 = por %p260, %p261
      %p263 = scmp.ne.s32.totalorder %s251, %s252
      %p264 = scmp.eq.s32.totalorder %s32, 1
      %p265 = por %p263, %p264
      %p267 = scmp.ne.s32.totalorder %s252, %s266
      %p268 = scmp.eq.s32.totalorder %s32, 0
      %p269 = por %p267, %p268
      %s271 = sadd.s32 %s270, 1
      %p274 = scmp.eq.s32.totalorder %s26, 1
      %p275 = scmp.ne.s32.totalorder %s270, %s272
      %p276 = scmp.eq.s32.totalorder %s26, 0
      %p277 = por %p275, %p276
      %p278 = scmp.ne.s32.totalorder %s270, %s272
      %p279 = scmp.eq.s32.totalorder %s31, 1
      %p280 = por %p278, %p279
      %p281 = scmp.ne.s32.totalorder %s272, %s273
      %p282 = scmp.eq.s32.totalorder %s31, 0
      %p283 = por %p281, %p282
      %p284 = scmp.ne.s32.totalorder %s272, %s273
      %p285 = scmp.eq.s32.totalorder %s32, 1
      %p286 = por %p284, %p285
      %p288 = scmp.ne.s32.totalorder %s273, %s287
      %p289 = scmp.eq.s32.totalorder %s32, 0
      %p290 = por %p288, %p289
      %s292 = sadd.s32 %s291, 1
      %p295 = scmp.eq.s32.totalorder %s26, 1
      %p296 = scmp.ne.s32.totalorder %s291, %s293
      %p297 = scmp.eq.s32.totalorder %s26, 0
      %p298 = por %p296, %p297
      %p299 = scmp.ne.s32.totalorder %s291, %s293
      %p300 = scmp.eq.s32.totalorder %s31, 1
      %p301 = por %p299, %p300
      %p302 = scmp.ne.s32.totalorder %s293, %s294
      %p303 = scmp.eq.s32.totalorder %s31, 0
      %p304 = por %p302, %p303
      %p305 = scmp.ne.s32.totalorder %s293, %s294
      %p306 = scmp.eq.s32.totalorder %s32, 1
      %p307 = por %p305, %p306
      %p309 = scmp.ne.s32.totalorder %s294, %s308
      %p310 = scmp.eq.s32.totalorder %s32, 0
      %p311 = por %p309, %p310
      %s313 = sadd.s32 %s312, 1
      %p316 = scmp.eq.s32.totalorder %s26, 1
      %p317 = scmp.ne.s32.totalorder %s312, %s314
      %p318 = scmp.eq.s32.totalorder %s26, 0
      %p319 = por %p317, %p318
      %p320 = scmp.ne.s32.totalorder %s312, %s314
      %p321 = scmp.eq.s32.totalorder %s31, 1
      %p322 = por %p320, %p321
      %p323 = scmp.ne.s32.totalorder %s314, %s315
      %p324 = scmp.eq.s32.totalorder %s31, 0
      %p325 = por %p323, %p324
      %p326 = scmp.ne.s32.totalorder %s314, %s315
      %p327 = scmp.eq.s32.totalorder %s32, 1
      %p328 = por %p326, %p327
      %p330 = scmp.ne.s32.totalorder %s315, %s329
      %p331 = scmp.eq.s32.totalorder %s32, 0
      %p332 = por %p330, %p331
      %s334 = sadd.s32 %s333, 1
      %p337 = scmp.eq.s32.totalorder %s26, 1
      %p338 = scmp.ne.s32.totalorder %s333, %s335
      %p339 = scmp.eq.s32.totalorder %s26, 0
      %p340 = por %p338, %p339
      %p341 = scmp.ne.s32.totalorder %s333, %s335
      %p342 = scmp.eq.s32.totalorder %s31, 1
      %p343 = por %p341, %p342
      %p344 = scmp.ne.s32.totalorder %s335, %s336
      %p345 = scmp.eq.s32.totalorder %s31, 0
      %p346 = por %p344, %p345
      %p347 = scmp.ne.s32.totalorder %s335, %s336
      %p348 = scmp.eq.s32.totalorder %s32, 1
      %p349 = por %p347, %p348
      %p351 = scmp.ne.s32.totalorder %s336, %s350
      %p352 = scmp.eq.s32.totalorder %s32, 0
      %p353 = por %p351, %p352
      %s354 = ssub.s32 %s26, %s33
      %p355 = scmp.eq.s32.totalorder %s354, 0
      %s357 = sadd.s32 %s356, 1
      %s358 = scalar_select %p355, %s356, %s357
      %p361 = pneg %p355
      %p362 = scmp.eq.s32.totalorder %s26, 1
      %p363 = por %p361, %p362
      %p364 = scmp.ne.s32.totalorder %s356, %s359
      %p365 = scmp.eq.s32.totalorder %s26, 0
      %p366 = por %p364, %p365
      %p367 = scmp.ne.s32.totalorder %s356, %s359
      %p368 = scmp.eq.s32.totalorder %s31, 1
      %p369 = por %p367, %p368
      %p370 = scmp.ne.s32.totalorder %s359, %s360
      %p371 = scmp.eq.s32.totalorder %s31, 0
      %p372 = por %p370, %p371
      %p373 = scmp.ne.s32.totalorder %s359, %s360
      %p374 = scmp.eq.s32.totalorder %s32, 1
      %p375 = por %p373, %p374
      %p377 = scmp.ne.s32.totalorder %s360, %s376
      %p378 = scmp.eq.s32.totalorder %s32, 0
      %p379 = por %p377, %p378
      %p380 = scmp.le.s32.totalorder 1, %s26
      %p381 = scmp.lt.s32.totalorder %s26, 3
      %p382 = pnand %p380, %p381
      %p383 = pneg %p382
      // Predicated region
      $region9: #{tpu_custom_call.1} parent=5 // pred_check
        _
      $region10: #{tpu_custom_call.1} parent=5 // pred_check_branch
        %385 = sbr.rel (%p382) target = $region12
      $region11: #{tpu_custom_call.1} parent=5 // pred_region
        %s386 = ssub.s32 %s26, 1
        // Predicated region
        $region13: #{tpu_custom_call.1} parent=11 // pred_check
          %p387 = pneg %p73
        $region14: #{tpu_custom_call.1} parent=11 // pred_check_branch
          %389 = sbr.rel (%p387) target = $region16
        $region15: #{tpu_custom_call.1} parent=11 // pred_region
          _
        $region16: #{tpu_custom_call.1} parent=11 // pred_fallthru
          _
        // Predicated region
        $region17: #{tpu_custom_call.1} parent=11 // pred_check
          %p390 = pneg %p94
        $region18: #{tpu_custom_call.1} parent=11 // pred_check_branch
          %392 = sbr.rel (%p390) target = $region20
        $region19: #{tpu_custom_call.1} parent=11 // pred_region
          _
        $region20: #{tpu_custom_call.1} parent=11 // pred_fallthru
          _
        // Predicated region
        $region21: #{tpu_custom_call.1} parent=11 // pred_check
          %p393 = pneg %p115
        $region22: #{tpu_custom_call.1} parent=11 // pred_check_branch
          %395 = sbr.rel (%p393) target = $region24
        $region23: #{tpu_custom_call.1} parent=11 // pred_region
          _
        $region24: #{tpu_custom_call.1} parent=11 // pred_fallthru
          _
        // Predicated region
        $region25: #{tpu_custom_call.1} parent=11 // pred_check
          %p396 = pneg %p136
        $region26: #{tpu_custom_call.1} parent=11 // pred_check_branch
          %398 = sbr.rel (%p396) target = $region28
        $region27: #{tpu_custom_call.1} parent=11 // pred_region
          _
        $region28: #{tpu_custom_call.1} parent=11 // pred_fallthru
          _
        // Predicated region
        $region29: #{tpu_custom_call.1} parent=11 // pred_check
          %p399 = pneg %p157
        $region30: #{tpu_custom_call.1} parent=11 // pred_check_branch
          %401 = sbr.rel (%p399) target = $region32
        $region31: #{tpu_custom_call.1} parent=11 // pred_region
          %s403 = ssub.s32 16, 16
          %404 = vsyncadd [#allocation3], %s403
          %s406 = sshll.u32 [#allocation2], 4
          %s407 = int_to_ptr.vmem [resolvable:$true] %s406
          %409 = dma.hbm_to_vmem [thread:$0]  %s5, 16, %s407, [#allocation3]
        $region32: #{tpu_custom_call.1} parent=11 // pred_fallthru
          _
        // Predicated region
        $region33: #{tpu_custom_call.1} parent=11 // pred_check
          %p410 = pneg %p178
        $region34: #{tpu_custom_call.1} parent=11 // pred_check_branch
          %412 = sbr.rel (%p410) target = $region36
        $region35: #{tpu_custom_call.1} parent=11 // pred_region
          %s414 = ssub.s32 16, 16
          %415 = vsyncadd [#allocation6], %s414
          %s417 = sshll.u32 [#allocation5], 4
          %s418 = int_to_ptr.vmem [resolvable:$true] %s417
          %420 = dma.hbm_to_vmem [thread:$0]  %s6, 16, %s418, [#allocation6]
        $region36: #{tpu_custom_call.1} parent=11 // pred_fallthru
          _
        // Predicated region
        $region37: #{tpu_custom_call.1} parent=11 // pred_check
          %p421 = pneg %p199
        $region38: #{tpu_custom_call.1} parent=11 // pred_check_branch
          %423 = sbr.rel (%p421) target = $region40
        $region39: #{tpu_custom_call.1} parent=11 // pred_region
          _
        $region40: #{tpu_custom_call.1} parent=11 // pred_fallthru
          _
        // Predicated region
        $region41: #{tpu_custom_call.1} parent=11 // pred_check
          %p424 = pneg %p220
        $region42: #{tpu_custom_call.1} parent=11 // pred_check_branch
          %426 = sbr.rel (%p424) target = $region44
        $region43: #{tpu_custom_call.1} parent=11 // pred_region
          %s428 = ssub.s32 16, 16
          %429 = vsyncadd [#allocation6], %s428
          %s431 = sshll.u32 [#allocation7], 4
          %s432 = int_to_ptr.vmem [resolvable:$true] %s431
          %434 = dma.hbm_to_vmem [thread:$0]  %s8, 16, %s432, [#allocation6]
        $region44: #{tpu_custom_call.1} parent=11 // pred_fallthru
          _
        // Predicated region
        $region45: #{tpu_custom_call.1} parent=11 // pred_check
          %p435 = pneg %p241
        $region46: #{tpu_custom_call.1} parent=11 // pred_check_branch
          %437 = sbr.rel (%p435) target = $region48
        $region47: #{tpu_custom_call.1} parent=11 // pred_region
          _
        $region48: #{tpu_custom_call.1} parent=11 // pred_fallthru
          _
        // Predicated region
        $region49: #{tpu_custom_call.1} parent=11 // pred_check
          %p438 = pneg %p262
        $region50: #{tpu_custom_call.1} parent=11 // pred_check_branch
          %440 = sbr.rel (%p438) target = $region52
        $region51: #{tpu_custom_call.1} parent=11 // pred_region
          _
        $region52: #{tpu_custom_call.1} parent=11 // pred_fallthru
          _
        // Predicated region
        $region53: #{tpu_custom_call.1} parent=11 // pred_check
          %p441 = pneg %p283
        $region54: #{tpu_custom_call.1} parent=11 // pred_check_branch
          %443 = sbr.rel (%p441) target = $region56
        $region55: #{tpu_custom_call.1} parent=11 // pred_region
          _
        $region56: #{tpu_custom_call.1} parent=11 // pred_fallthru
          _
        // Predicated region
        $region57: #{tpu_custom_call.1} parent=11 // pred_check
          %p444 = pneg %p304
        $region58: #{tpu_custom_call.1} parent=11 // pred_check_branch
          %446 = sbr.rel (%p444) target = $region60
        $region59: #{tpu_custom_call.1} parent=11 // pred_region
          _
        $region60: #{tpu_custom_call.1} parent=11 // pred_fallthru
          _
        // Predicated region
        $region61: #{tpu_custom_call.1} parent=11 // pred_check
          %p447 = pneg %p325
        $region62: #{tpu_custom_call.1} parent=11 // pred_check_branch
          %449 = sbr.rel (%p447) target = $region64
        $region63: #{tpu_custom_call.1} parent=11 // pred_region
          _
        $region64: #{tpu_custom_call.1} parent=11 // pred_fallthru
          _
        // Predicated region
        $region65: #{tpu_custom_call.1} parent=11 // pred_check
          %p450 = pneg %p346
        $region66: #{tpu_custom_call.1} parent=11 // pred_check_branch
          %452 = sbr.rel (%p450) target = $region68
        $region67: #{tpu_custom_call.1} parent=11 // pred_region
          _
        $region68: #{tpu_custom_call.1} parent=11 // pred_fallthru
          _
      $region12: #{tpu_custom_call.1} parent=5 // pred_fallthru
        _
      %p453 = scmp.lt.s32.totalorder %s26, 2
      // Predicated region
      $region69: #{tpu_custom_call.1} parent=5 // pred_check
        %p454 = pneg %p453
      $region70: #{tpu_custom_call.1} parent=5 // pred_check_branch
        %456 = sbr.rel (%p454) target = $region72
      $region71: #{tpu_custom_call.1} parent=5 // pred_region
        // Predicated region
        $region73: #{tpu_custom_call.1} parent=71 // pred_check
          %p457 = pneg %p46
        $region74: #{tpu_custom_call.1} parent=71 // pred_check_branch
          %459 = sbr.rel (%p457) target = $region76
        $region75: #{tpu_custom_call.1} parent=71 // pred_region
          %p460 = scmp.lt.s32.totalorder %s26, 1
          %s461 = scalar_select %p460, %s26, 1
          %s462 = smul.addr %s461, 4
          %s463 = scalar_lea.vmem %s0, %s462
        $region76: #{tpu_custom_call.1} parent=71 // pred_fallthru
          _
      $region72: #{tpu_custom_call.1} parent=5 // pred_fallthru
        _
      %p464 = scmp.le.s32.totalorder 1, %s26
      %p465 = scmp.lt.s32.totalorder %s26, 3
      %p466 = pnand %p464, %p465
      %p467 = pneg %p466
      // Predicated region
      $region77: #{tpu_custom_call.1} parent=5 // pred_check
        _
      $region78: #{tpu_custom_call.1} parent=5 // pred_check_branch
        %469 = sbr.rel (%p466) target = $region80
      $region79: #{tpu_custom_call.1} parent=5 // pred_region
        %s470 = ssub.s32 %s26, 1
        // Predicated region
        $region81: #{tpu_custom_call.1} parent=79 // pred_check
          %p471 = pneg %p157
        $region82: #{tpu_custom_call.1} parent=79 // pred_check_branch
          %473 = sbr.rel (%p471) target = $region84
        $region83: #{tpu_custom_call.1} parent=79 // pred_region
          %474 = dma.done [#allocation3], 16
        $region84: #{tpu_custom_call.1} parent=79 // pred_fallthru
          _
        // Predicated region
        $region85: #{tpu_custom_call.1} parent=79 // pred_check
          %p475 = pneg %p178
        $region86: #{tpu_custom_call.1} parent=79 // pred_check_branch
          %477 = sbr.rel (%p475) target = $region88
        $region87: #{tpu_custom_call.1} parent=79 // pred_region
          %478 = dma.done [#allocation6], 16
        $region88: #{tpu_custom_call.1} parent=79 // pred_fallthru
          _
        // Predicated region
        $region89: #{tpu_custom_call.1} parent=79 // pred_check
          %p479 = pneg %p220
        $region90: #{tpu_custom_call.1} parent=79 // pred_check_branch
          %481 = sbr.rel (%p479) target = $region92
        $region91: #{tpu_custom_call.1} parent=79 // pred_region
          %482 = dma.done [#allocation6], 16
        $region92: #{tpu_custom_call.1} parent=79 // pred_fallthru
          _
        %p483 = scmp.lt.s32.totalorder %s31, 1
        %s484 = scalar_select %p483, %s31, 1
        %s485 = smul.addr %s484, 4
        %s486 = scalar_lea.vmem %s0, %s485
        %p487 = pneg %p52
        %p488 = pneg %p49
        %p489 = pneg %p73
        %p490 = pneg %p70
        %p491 = pneg %p94
        %p492 = pneg %p91
        %p493 = pneg %p115
        %p494 = pneg %p112
        %p495 = pneg %p136
        %p496 = pneg %p133
        %p497 = pneg %p157
        %p498 = pneg %p154
        %p499 = pneg %p178
        %p500 = pneg %p175
        %p501 = pneg %p199
        %p502 = pneg %p196
        %p503 = pneg %p220
        %p504 = pneg %p217
        %p505 = pneg %p241
        %p506 = pneg %p238
        %p507 = pneg %p262
        %p508 = pneg %p259
        %p509 = pneg %p283
        %p510 = pneg %p280
        %p511 = pneg %p304
        %p512 = pneg %p301
        %p513 = pneg %p325
        %p514 = pneg %p322
        %p515 = pneg %p346
        %p516 = pneg %p343
        %p517 = pneg %p372
        %p518 = pneg %p369
        %s519 = sand.u32 %s359, 1
        %s520 = scalar_lea.sflag [#allocation4], %s519
        %s521 = sand.u32 %s359, 1
        %s522 = smul.addr %s521, 8
        %s523 = scalar_lea.vmem [#allocation8], %s522
        %p524 = scmp.lt.s32.totalorder %s31, 1
        %s525 = scalar_select %p524, %s31, 1
        %s526 = smul.addr %s525, 4
        %s527 = scalar_lea.vmem %s0, %s526
        %v529 = vld [vmem:[%s527] sm:$0xf]
        %vm530 = vcmask 1043456
        %v531 = vsel %vm530, %v529, 0.0
        %532 = vadd.xlane.f32.xlu0 %v531
        %v533 = vpop.xlane.xlu0 %532
        %v534 = vmul.f32 %v533, 0.0625
        %v535 = vmul.f32 %v529, %v529
        %v536 = vsel %vm530, %v535, 0.0
        %537 = vadd.xlane.f32.xlu0 %v536
        %v538 = vpop.xlane.xlu0 %537
        %v539 = vmul.f32 %v538, 0.0625
        %v540 = vmul.f32 %v534, %v534
        %v541 = vsub.f32 %v539, %v540
        %v542 = vmax.f32 %v541, 0.0
        %v543 = vsub.f32 %v529, %v534
        %v544 = vadd.f32 %v542, 0.001
        %v545 = vrsqrt.pop %v544
        %v546 = vmul.f32 %v543, %v545
        %v547 = vld [vmem:[%s1] sm:$0xf]
        %549 = vset.pattern.permute.xlu0 0
        %550 = vperm.xlu0 %549, %v547
        %v551 = vpop.permute.xlu0 %550
        %v553 = vmul.f32 %v546, %v551
        %v554 = vld [vmem:[%s2] sm:$0xf]
        %556 = vset.pattern.permute.xlu0 0
        %557 = vperm.xlu0 %556, %v554
        %v558 = vpop.permute.xlu0 %557
        %v560 = vadd.f32 %v553, %v558
        %v561 = vmax.f32 %v560, 0.0
        %v562 = vld [vmem:[%s3] sm:$0xf]
        %v563 = vpack.c.bf16 %v561, %v561
        %v564 = vld [vmem:[%s4] sm:$0xff]
        %566 = vset.pattern.permute.xlu0 0
        %567 = vperm.xlu0 %566, %v564
        %v568 = vpop.permute.xlu0 %567
        %vm570 = vcmask 31744
        %v572 = vsel %vm570, %v562, 0
        %vm574 = vcmask 1041408
        %v576 = vsel %vm574, %v563, 0
        %578 = vmatprep.subr.bf16.mxu0 0
        %579 = vmatpush1.bf16.msra.mxu0 0
        %580 = vmatprep.subr.bf16.mxu0 0
        %581 = vmatpush1.bf16.msra.mxu0 0
        %582 = vmatprep.subr.bf16.mxu0 0
        %583 = vmatpush1.bf16.msra.mxu0 0
        %584 = vmatprep.subr.bf16.mxu0 0
        %585 = vmatpush1.bf16.msra.mxu0 0
        %586 = vmatprep.subr.bf16.mxu0 0
        %587 = vmatpush1.bf16.msra.mxu0 0
        %588 = vmatprep.subr.bf16.mxu0 0
        %589 = vmatpush1.bf16.msra.mxu0 0
        %590 = vmatprep.subr.bf16.mxu0 0
        %591 = vmatpush1.bf16.msra.mxu0 0
        %592 = vmatprep.subr.bf16.mxu0 0
        %593 = vmatpush1.bf16.msra.mxu0 %v576
        %594 = vmatprep.subr.bf16.mxu0 0
        %595 = vmatpush2.bf16.msra.mxu0 0
        %596 = vmatprep.subr.bf16.mxu0 0
        %597 = vmatpush2.bf16.msra.mxu0 0
        %598 = vmatprep.subr.bf16.mxu0 0
        %599 = vmatpush2.bf16.msra.mxu0 0
        %600 = vmatprep.subr.bf16.mxu0 0
        %601 = vmatpush2.bf16.msra.mxu0 0
        %602 = vmatprep.subr.bf16.mxu0 0
        %603 = vmatpush2.bf16.msra.mxu0 0
        %604 = vmatprep.subr.bf16.mxu0 0
        %605 = vmatpush2.bf16.msra.mxu0 0
        %606 = vmatprep.subr.bf16.mxu0 0
        %607 = vmatpush2.bf16.msra.mxu0 0
        %608 = vmatprep.subr.bf16.mxu0 0
        %609 = vmatpush2.bf16.msra.mxu0 0
        %610 = vmatprep.mubr.bf16.mxu0 0
        %611 = vmatmul.mubr.bf16.gmra.mxu0 %v572
        %v612 = vpop.f32.mrf.mxu0
        %v613 = vadd.f32 %v568, %v612
        %v614 = vpop.f32.mrf.mxu0
        %v615 = vpop.f32.mrf.mxu0
        %v616 = vpop.f32.mrf.mxu0
        %617 = vdwg.mxu0
        %v618 = vlaneseq
        %v619 = vand.u32 %v618, 127
        %vm620 = vcmp.lt.s32.totalorder %v619, 16
        %v621 = vsel %vm620, 1, 0
        %vm622 = vcmp.eq.s32.totalorder %v621, 1
        %v623 = vsel %vm622, %v613, 0.0
        %v624 = vld [vmem:[#allocation2] sm:$0x1]
        %v626 = vlaneseq
        %v627 = vshrl.u32 %v626, 7
        %v628 = vsub.s32 0, %v627
        %v629 = vrot.slane %v624, %v628
        %v631 = vmul.f32 %v623, %v629
        %v632 = vld [vmem:[#allocation5] sm:$0x1]
        %v634 = vlaneseq
        %v635 = vshrl.u32 %v634, 7
        %v636 = vsub.s32 0, %v635
        %v637 = vrot.slane %v632, %v636
        %v639 = vadd.f32 %v631, %v637
        %v640 = vmax.f32 %v639, 0.0
        %v641 = vpack.c.bf16 %v640, %v640
        %v642 = vld [vmem:[%s7] sm:$0xf]
        %v643 = vld [vmem:[%s7 + $0x4] sm:$0xf]
        %v644 = vld [vmem:[%s7 + $0x8] sm:$0xf]
        %v645 = vld [vmem:[%s7 + $0xc] sm:$0xf]
        %v646 = vld [vmem:[%s7 + $0x10] sm:$0xf]
        %v647 = vld [vmem:[%s7 + $0x14] sm:$0xf]
        %v648 = vld [vmem:[%s7 + $0x18] sm:$0xf]
        %v649 = vld [vmem:[%s7 + $0x1c] sm:$0xf]
        %v650 = vld [vmem:[%s7 + $0x20] sm:$0xf]
        %v651 = vld [vmem:[%s7 + $0x24] sm:$0xf]
        %v652 = vld [vmem:[%s7 + $0x28] sm:$0xf]
        %v653 = vld [vmem:[%s7 + $0x2c] sm:$0xf]
        %v654 = vld [vmem:[%s7 + $0x30] sm:$0xf]
        %v655 = vld [vmem:[%s7 + $0x34] sm:$0xf]
        %v656 = vld [vmem:[%s7 + $0x38] sm:$0xf]
        %v657 = vld [vmem:[%s7 + $0x3c] sm:$0xf]
        %v658 = vld [vmem:[#allocation7] sm:$0x1]
        %v660 = vlaneseq
        %v661 = vshrl.u32 %v660, 7
        %v662 = vsub.s32 0, %v661
        %v663 = vrot.slane %v658, %v662
        %v681 = vunpack.c.l.b16 %v642
        %v682 = vunpack.c.l.b16 %v643
        %v683 = vunpack.c.l.b16 %v644
        %v684 = vunpack.c.l.b16 %v645
        %v685 = vunpack.c.l.b16 %v646
        %v686 = vunpack.c.l.b16 %v647
        %v687 = vunpack.c.l.b16 %v648
        %v688 = vunpack.c.l.b16 %v649
        %v689 = vunpack.c.l.b16 %v650
        %v690 = vunpack.c.l.b16 %v651
        %v691 = vunpack.c.l.b16 %v652
        %v692 = vunpack.c.l.b16 %v653
        %v693 = vunpack.c.l.b16 %v654
        %v694 = vunpack.c.l.b16 %v655
        %v695 = vunpack.c.l.b16 %v656
        %v696 = vunpack.c.l.b16 %v657
        %v697 = vpack.c.b16 %v682, %v681
        %v698 = vpack.c.b16 %v684, %v683
        %v699 = vpack.c.b16 %v686, %v685
        %v700 = vpack.c.b16 %v688, %v687
        %v701 = vpack.c.b16 %v690, %v689
        %v702 = vpack.c.b16 %v692, %v691
        %v703 = vpack.c.b16 %v694, %v693
        %v704 = vpack.c.b16 %v696, %v695
        %713 = vmatprep.subr.bf16.mxu0 0
        %714 = vmatpush1.bf16.msra.mxu0 %v704
        %715 = vmatprep.subr.bf16.mxu0 0
        %716 = vmatpush1.bf16.msra.mxu0 %v703
        %717 = vmatprep.subr.bf16.mxu0 0
        %718 = vmatpush1.bf16.msra.mxu0 %v702
        %719 = vmatprep.subr.bf16.mxu0 0
        %720 = vmatpush1.bf16.msra.mxu0 %v701
        %721 = vmatprep.subr.bf16.mxu0 0
        %722 = vmatpush1.bf16.msra.mxu0 %v700
        %723 = vmatprep.subr.bf16.mxu0 0
        %724 = vmatpush1.bf16.msra.mxu0 %v699
        %725 = vmatprep.subr.bf16.mxu0 0
        %726 = vmatpush1.bf16.msra.mxu0 %v698
        %727 = vmatprep.subr.bf16.mxu0 0
        %728 = vmatpush1.bf16.msra.mxu0 %v697
        %729 = vmatprep.subr.bf16.mxu0 0
        %730 = vmatpush2.bf16.msra.mxu0 0
        %731 = vmatprep.subr.bf16.mxu0 0
        %732 = vmatpush2.bf16.msra.mxu0 0
        %733 = vmatprep.subr.bf16.mxu0 0
        %734 = vmatpush2.bf16.msra.mxu0 0
        %735 = vmatprep.subr.bf16.mxu0 0
        %736 = vmatpush2.bf16.msra.mxu0 0
        %737 = vmatprep.subr.bf16.mxu0 0
        %738 = vmatpush2.bf16.msra.mxu0 0
        %739 = vmatprep.subr.bf16.mxu0 0
        %740 = vmatpush2.bf16.msra.mxu0 0
        %741 = vmatprep.subr.bf16.mxu0 0
        %742 = vmatpush2.bf16.msra.mxu0 0
        %743 = vmatprep.subr.bf16.mxu0 0
        %744 = vmatpush2.bf16.msra.mxu0 0
        %745 = vmatprep.mubr.bf16.mxu0 0
        %746 = vmatmul.mubr.bf16.gmra.mxu0 %v641
        %v747 = vpop.f32.mrf.mxu0
        %v748 = vadd.f32 %v663, %v747
        %v749 = vpop.f32.mrf.mxu0
        %v750 = vpop.f32.mrf.mxu0
        %v751 = vpop.f32.mrf.mxu0
        %752 = vdwg.mxu0
        %v753 = vadd.f32 %v623, %v748
        %754 = vadd.xlane.f32.xlu0 %v753
        %v755 = vpop.xlane.xlu0 %754
        %v756 = vmul.f32 %v755, 0.0625
        %v757 = vmul.f32 %v753, %v753
        %758 = vadd.xlane.f32.xlu0 %v757
        %v759 = vpop.xlane.xlu0 %758
        %v760 = vmul.f32 %v759, 0.0625
        %v761 = vmul.f32 %v756, %v756
        %v762 = vsub.f32 %v760, %v761
        %v763 = vmax.f32 %v762, 0.0
        %v764 = vsub.f32 %v753, %v756
        %v765 = vadd.f32 %v763, 0.001
        %v766 = vrsqrt.pop %v765
        %v767 = vmul.f32 %v764, %v766
        %v768 = vld [vmem:[%s9] sm:$0xff]
        %770 = vset.pattern.permute.xlu0 0
        %771 = vperm.xlu0 %770, %v768
        %v772 = vpop.permute.xlu0 %771
        %v774 = vmul.f32 %v767, %v772
        %v775 = vld [vmem:[%s10] sm:$0xff]
        %777 = vset.pattern.permute.xlu0 0
        %778 = vperm.xlu0 %777, %v775
        %v779 = vpop.permute.xlu0 %778
        %v781 = vadd.f32 %v774, %v779
        %v782 = vmax.f32 %v781, 0.0
        %v783 = vld [vmem:[%s11] sm:$0xf]
        %v784 = vpack.c.bf16 %v782, %v782
        %v785 = vld [vmem:[%s12] sm:$0xff]
        %787 = vset.pattern.permute.xlu0 0
        %788 = vperm.xlu0 %787, %v785
        %v789 = vpop.permute.xlu0 %788
        %vm791 = vcmask 64512
        %v793 = vsel %vm791, %v783, 0
        %v796 = vsel %vm530, %v784, 0
        %798 = vmatprep.subr.bf16.mxu0 0
        %799 = vmatpush1.bf16.msra.mxu0 0
        %800 = vmatprep.subr.bf16.mxu0 0
        %801 = vmatpush1.bf16.msra.mxu0 0
        %802 = vmatprep.subr.bf16.mxu0 0
        %803 = vmatpush1.bf16.msra.mxu0 0
        %804 = vmatprep.subr.bf16.mxu0 0
        %805 = vmatpush1.bf16.msra.mxu0 0
        %806 = vmatprep.subr.bf16.mxu0 0
        %807 = vmatpush1.bf16.msra.mxu0 0
        %808 = vmatprep.subr.bf16.mxu0 0
        %809 = vmatpush1.bf16.msra.mxu0 0
        %810 = vmatprep.subr.bf16.mxu0 0
        %811 = vmatpush1.bf16.msra.mxu0 0
        %812 = vmatprep.subr.bf16.mxu0 0
        %813 = vmatpush1.bf16.msra.mxu0 %v796
        %814 = vmatprep.subr.bf16.mxu0 0
        %815 = vmatpush2.bf16.msra.mxu0 0
        %816 = vmatprep.subr.bf16.mxu0 0
        %817 = vmatpush2.bf16.msra.mxu0 0
        %818 = vmatprep.subr.bf16.mxu0 0
        %819 = vmatpush2.bf16.msra.mxu0 0
        %820 = vmatprep.subr.bf16.mxu0 0
        %821 = vmatpush2.bf16.msra.mxu0 0
        %822 = vmatprep.subr.bf16.mxu0 0
        %823 = vmatpush2.bf16.msra.mxu0 0
        %824 = vmatprep.subr.bf16.mxu0 0
        %825 = vmatpush2.bf16.msra.mxu0 0
        %826 = vmatprep.subr.bf16.mxu0 0
        %827 = vmatpush2.bf16.msra.mxu0 0
        %828 = vmatprep.subr.bf16.mxu0 0
        %829 = vmatpush2.bf16.msra.mxu0 0
        %830 = vmatprep.mubr.bf16.mxu0 0
        %831 = vmatmul.mubr.bf16.gmra.mxu0 %v793
        %v832 = vpop.f32.mrf.mxu0
        %v833 = vadd.f32 %v789, %v832
        %v834 = vpop.f32.mrf.mxu0
        %v835 = vpop.f32.mrf.mxu0
        %v836 = vpop.f32.mrf.mxu0
        %837 = vdwg.mxu0
        %v838 = vld [vmem:[%s13] sm:$0xf]
        %v839 = vpack.c.bf16 %v529, %v529
        %v840 = vld [vmem:[%s14] sm:$0xff]
        %842 = vset.pattern.permute.xlu0 0
        %843 = vperm.xlu0 %842, %v840
        %v844 = vpop.permute.xlu0 %843
        %v847 = vsel %vm570, %v838, 0
        %v850 = vsel %vm574, %v839, 0
        %852 = vmatprep.subr.bf16.mxu0 0
        %853 = vmatpush1.bf16.msra.mxu0 0
        %854 = vmatprep.subr.bf16.mxu0 0
        %855 = vmatpush1.bf16.msra.mxu0 0
        %856 = vmatprep.subr.bf16.mxu0 0
        %857 = vmatpush1.bf16.msra.mxu0 0
        %858 = vmatprep.subr.bf16.mxu0 0
        %859 = vmatpush1.bf16.msra.mxu0 0
        %860 = vmatprep.subr.bf16.mxu0 0
        %861 = vmatpush1.bf16.msra.mxu0 0
        %862 = vmatprep.subr.bf16.mxu0 0
        %863 = vmatpush1.bf16.msra.mxu0 0
        %864 = vmatprep.subr.bf16.mxu0 0
        %865 = vmatpush1.bf16.msra.mxu0 0
        %866 = vmatprep.subr.bf16.mxu0 0
        %867 = vmatpush1.bf16.msra.mxu0 %v850
        %868 = vmatprep.subr.bf16.mxu0 0
        %869 = vmatpush2.bf16.msra.mxu0 0
        %870 = vmatprep.subr.bf16.mxu0 0
        %871 = vmatpush2.bf16.msra.mxu0 0
        %872 = vmatprep.subr.bf16.mxu0 0
        %873 = vmatpush2.bf16.msra.mxu0 0
        %874 = vmatprep.subr.bf16.mxu0 0
        %875 = vmatpush2.bf16.msra.mxu0 0
        %876 = vmatprep.subr.bf16.mxu0 0
        %877 = vmatpush2.bf16.msra.mxu0 0
        %878 = vmatprep.subr.bf16.mxu0 0
        %879 = vmatpush2.bf16.msra.mxu0 0
        %880 = vmatprep.subr.bf16.mxu0 0
        %881 = vmatpush2.bf16.msra.mxu0 0
        %882 = vmatprep.subr.bf16.mxu0 0
        %883 = vmatpush2.bf16.msra.mxu0 0
        %884 = vmatprep.mubr.bf16.mxu0 0
        %885 = vmatmul.mubr.bf16.gmra.mxu0 %v847
        %v886 = vpop.f32.mrf.mxu0
        %v887 = vadd.f32 %v844, %v886
        %v888 = vpop.f32.mrf.mxu0
        %v889 = vpop.f32.mrf.mxu0
        %v890 = vpop.f32.mrf.mxu0
        %891 = vdwg.mxu0
        %v892 = vadd.f32 %v833, %v887
        %893 = vst [vmem:[%s523] sm:$0xff] %v892
        %s894 = sand.u32 %s359, 1
        %s895 = scalar_lea.sflag [#allocation4], %s894
        %s896 = sand.u32 %s359, 1
        %s897 = smul.addr %s896, 8
        %s898 = scalar_lea.vmem [#allocation8], %s897
        // Predicated region
        $region93: #{tpu_custom_call.1} parent=79 // pred_check
          %p899 = pneg %p369
        $region94: #{tpu_custom_call.1} parent=79 // pred_check_branch
          %901 = sbr.rel (%p899) target = $region96
        $region95: #{tpu_custom_call.1} parent=79 // pred_region
          %s903 = ssub.s32 128, 128
          %904 = vsyncadd %s895, %s903
          %s905 = smul.addr %s31, 128
          %s906 = scalar_lea.hbm %s15, %s905
          %s908 = sshll.u32 %s898, 4
          %s909 = int_to_ptr.vmem [resolvable:$true] %s908
          %911 = dma.vmem_to_hbm [thread:$0]  %s909, 128, %s906, %s895
        $region96: #{tpu_custom_call.1} parent=79 // pred_fallthru
          _
      $region80: #{tpu_custom_call.1} parent=5 // pred_fallthru
        _
      %p912 = scmp.le.s32.totalorder 2, %s26
      // Predicated region
      $region97: #{tpu_custom_call.1} parent=5 // pred_check
        %p913 = pneg %p912
      $region98: #{tpu_custom_call.1} parent=5 // pred_check_branch
        %915 = sbr.rel (%p913) target = $region100
      $region99: #{tpu_custom_call.1} parent=5 // pred_region
        %s916 = ssub.s32 %s26, 2
        // Predicated region
        $region101: #{tpu_custom_call.1} parent=99 // pred_check
          %p917 = pneg %p375
        $region102: #{tpu_custom_call.1} parent=99 // pred_check_branch
          %919 = sbr.rel (%p917) target = $region104
        $region103: #{tpu_custom_call.1} parent=99 // pred_region
          %s920 = sand.u32 %s360, 1
          %s921 = scalar_lea.sflag [#allocation4], %s920
          %s922 = sand.u32 %s360, 1
          %s923 = smul.addr %s922, 8
          %s924 = scalar_lea.vmem [#allocation8], %s923
          %925 = dma.done %s921, 128
        $region104: #{tpu_custom_call.1} parent=99 // pred_fallthru
          _
      $region100: #{tpu_custom_call.1} parent=5 // pred_fallthru
        _
    $region6: #{tpu_custom_call.1} parent=1 // loop_footer
      %s30 = sadd.s32 1, %s26
    $region7: #{tpu_custom_call.1} parent=1 // loop_footer_branch
      %25 = sbr.rel target = $region3
    $region8: #{tpu_custom_call.1} parent=1 // loop_exit
      _
    %926 = vsyncpa [#allocation3], 1
    %s927 = scalar_lea.sflag [#allocation3], 1
    %928 = vsyncpa %s927, 1
    %929 = vsyncpa [#allocation6], 1
    %930 = vsyncpa [#allocation4], 1
    %s931 = scalar_lea.sflag [#allocation4], 1
    %932 = vsyncpa %s931, 1

</llo_original>
